<compile_context>
chip_gen: v6e
topology: v6e:2x2x1
jax: 0.10.0
libtpu: 0.0.40
codegen_flags: <defaults>
</compile_context>

<pallas_src>
import jax
import jax.numpy as jnp
from jax import lax
from jax.experimental import pallas as pl
from jax.experimental.pallas import tpu as pltpu

_SMOOTH = 1e-07


def _dice_kernel(scores_ref, target_ref, w_ref,
                 soft_ref, loss_ref,
                 inter_acc, ssum_acc, tsum_acc):
    b = pl.program_id(0)

    @pl.when(b == 0)
    def _():
        inter_acc[...] = jnp.zeros_like(inter_acc)
        ssum_acc[...] = jnp.zeros_like(ssum_acc)
        tsum_acc[...] = jnp.zeros_like(tsum_acc)

    x = scores_ref[...]                    # (TB, C, HW) float32
    t = target_ref[...]                    # (TB, 1, HW) int32
    TB, C, HW = x.shape

    # softmax over the class (sublane) axis
    m = jnp.max(x, axis=1, keepdims=True)
    e = jnp.exp(x - m)
    soft = e / jnp.sum(e, axis=1, keepdims=True)
    soft_ref[...] = soft

    # class-membership mask (never written out as an f32 tensor)
    cls_idx = lax.broadcasted_iota(jnp.int32, (TB, C, HW), 1)
    mask = cls_idx == t                    # (TB, 1, HW) broadcast -> (TB, C, HW)

    # per-class partial sums: lane reduce with keepdims (class stays on the
    # sublane axis), then fold the batch-tile axis into the (C, 1) scratch.
    inter_p = jnp.sum(jnp.where(mask, soft, 0.0), axis=2, keepdims=True)  # (TB,C,1)
    ssum_p = jnp.sum(soft, axis=2, keepdims=True)                          # (TB,C,1)
    tsum_p = jnp.sum(mask.astype(jnp.float32), axis=2, keepdims=True)      # (TB,C,1)

    inter_acc[...] += jnp.sum(inter_p, axis=0)      # (C, 1)
    ssum_acc[...] += jnp.sum(ssum_p, axis=0)
    tsum_acc[...] += jnp.sum(tsum_p, axis=0)

    # fused final combine: smooth + per-class dice + weighted mean -> scalar
    @pl.when(b == pl.num_programs(0) - 1)
    def _():
        w = w_ref[...]                              # (C, 1)
        per_class = 1.0 - (2.0 * inter_acc[...] + _SMOOTH) / (
            ssum_acc[...] + tsum_acc[...] + _SMOOTH)
        loss_ref[...] = (jnp.sum(per_class * w, keepdims=True)
                         / jnp.sum(w, keepdims=True))


def _pick_batch_tile(B, C, HW, bytes_cap=4 << 20):
    """Largest divisor of B whose per-step tiles stay under bytes_cap."""
    per_b = 2 * C * HW * 4 + HW * 4        # scores in + softmax out + target
    tb = max(1, min(B, bytes_cap // max(per_b, 1)))
    while B % tb:
        tb -= 1
    return tb


def dice_loss(scores, target, weights):
    """Equivalent of DICELoss.forward.

    scores:  [B, C, H, W] float
    target:  [B, H, W] int (class ids in [0, C))
    weights: [C] float
    Returns (loss, softmax_scores [B,C,H,W], target_one_hot [B,C,H,W]).
    """
    B, C, H, W = scores.shape
    HW = H * W
    s = scores.reshape(B, C, HW).astype(jnp.float32)
    t = target.reshape(B, 1, HW).astype(jnp.int32)
    w = weights.reshape(C, 1).astype(jnp.float32)

    # TODO(synk): for huge H*W (v7x 64 MiB VMEM), also tile the HW (lane) axis.
    # TODO(synk): v7x megacore - split the batch across 2 TCs with per-core
    #             accumulator slabs reduced in the wrapper (needs 'parallel').
    TB = _pick_batch_tile(B, C, HW)
    grid = (B // TB,)

    soft, loss = pl.pallas_call(
        _dice_kernel,
        out_shape=(
            jax.ShapeDtypeStruct((B, C, HW), jnp.float32),   # softmax
            jax.ShapeDtypeStruct((1, 1), jnp.float32),       # scalar loss
        ),
        grid=grid,
        in_specs=[
            pl.BlockSpec((TB, C, HW), lambda b: (b, 0, 0)),
            pl.BlockSpec((TB, 1, HW), lambda b: (b, 0, 0)),
            pl.BlockSpec((C, 1), lambda b: (0, 0)),          # weights, resident
        ],
        out_specs=[
            pl.BlockSpec((TB, C, HW), lambda b: (b, 0, 0)),
            pl.BlockSpec((1, 1), lambda b: (0, 0)),
        ],
        scratch_shapes=[
            pltpu.VMEM((C, 1), jnp.float32),   # intersection per class
            pltpu.VMEM((C, 1), jnp.float32),   # sum(softmax) per class
            pltpu.VMEM((C, 1), jnp.float32),   # sum(one-hot) per class
        ],
        compiler_params=pltpu.CompilerParams(
            # accumulators persist across the batch axis -> must stay sequential
            dimension_semantics=("arbitrary",)),
    )(s, t, w)

    # one-hot is derivable from `target`; recomputing it here avoids B*C*HW*4
    # bytes of redundant HBM writeback from the kernel (~1/3 of total traffic).
    onehot = jax.nn.one_hot(target, C, axis=1, dtype=jnp.float32)

    return loss[0, 0], soft.reshape(B, C, H, W), onehot


if __name__ == "__main__":
    B, C, H, W = 2, 4, 16, 16
    key = jax.random.PRNGKey(0)
    k_scores, k_target = jax.random.split(key)

    scores = jax.random.normal(k_scores, (B, C, H, W), dtype=jnp.float32)
    target = jax.random.randint(k_target, (B, H, W), 0, C, dtype=jnp.int32)
    # deterministic per-class weights (module __init__ takes `weights` of shape [C])
    weights = jnp.array([1.0, 0.5, 2.0, 1.5], dtype=jnp.float32)

    loss, soft, onehot = dice_loss(scores, target, weights)
    jax.block_until_ready((loss, soft, onehot))

    # pure-JAX reference for a quick sanity check
    ref_soft = jax.nn.softmax(scores, axis=1)
    ref_onehot = jax.nn.one_hot(target, C, axis=1, dtype=jnp.float32)
    smooth = 1e-07
    inter_ref = jnp.sum(ref_soft * ref_onehot, axis=(0, 2, 3))
    ssum_ref = jnp.sum(ref_soft, axis=(0, 2, 3))
    tsum_ref = jnp.sum(ref_onehot, axis=(0, 2, 3))
    ref_loss = jnp.sum(
        (1.0 - (2.0 * inter_ref + smooth) / (ssum_ref + tsum_ref + smooth)) * weights
    ) / jnp.sum(weights)

    assert jnp.allclose(loss, ref_loss, atol=1e-5, rtol=1e-5)
    assert jnp.allclose(soft, ref_soft, atol=1e-5, rtol=1e-5)
    assert jnp.allclose(onehot, ref_onehot)

    print("KERNEL_OK")
</pallas_src>

<mosaic_0001>
module attributes {stable_mosaic.version = 11 : i64} {
  func.func @_dice_kernel(%arg0: i32, %arg1: memref<2x4x256xf32, #tpu.memory_space<vmem>>, %arg2: memref<2x1x256xi32, #tpu.memory_space<vmem>>, %arg3: memref<4x1xf32, #tpu.memory_space<vmem>>, %arg4: memref<2x4x256xf32, #tpu.memory_space<vmem>>, %arg5: memref<1x1xf32, #tpu.memory_space<vmem>>, %arg6: memref<4x1xf32, #tpu.memory_space<vmem>>, %arg7: memref<4x1xf32, #tpu.memory_space<vmem>>, %arg8: memref<4x1xf32, #tpu.memory_space<vmem>>) attributes {dimension_semantics = [#tpu.dimension_semantics<arbitrary>], iteration_bounds = array<i64: 1>, scalar_prefetch = 0 : i64, scratch_operands = 3 : i64, tpu.core_type = #tpu.core_type<tc>, window_params = [{transform_indices = @transform_0, window_bounds = array<i64: 2, 4, 256>}, {transform_indices = @transform_1, window_bounds = array<i64: 2, 1, 256>}, {pipeline_mode = #tpu.pipeline_mode<synchronous>, transform_indices = @transform_2, window_bounds = array<i64: 4, 1>}, {transform_indices = @transform_3, window_bounds = array<i64: 2, 4, 256>}, {pipeline_mode = #tpu.pipeline_mode<synchronous>, transform_indices = @transform_4, window_bounds = array<i64: 1, 1>}]} {
    %c0_i32 = arith.constant 0 : i32
    %0 = arith.cmpi eq, %arg0, %c0_i32 : i32
    %1 = arith.extui %0 : i1 to i32
    %c0_i32_0 = arith.constant 0 : i32
    %2 = arith.cmpi ne, %1, %c0_i32_0 : i32
    scf.if %2 {
      %cst_31 = arith.constant 0.000000e+00 : f32
      %43 = vector.broadcast %cst_31 : f32 to vector<4x1xf32>
      %c0_32 = arith.constant 0 : index
      %c0_33 = arith.constant 0 : index
      %44 = vector.load %arg6[%c0_32, %c0_33] : memref<4x1xf32, #tpu.memory_space<vmem>>, vector<4x1xf32>
      tpu.vector_store %arg6[%c0_32, %c0_33], %43 {strides = array<i32>} : memref<4x1xf32, #tpu.memory_space<vmem>>, vector<4x1xf32>,
      %cst_34 = arith.constant 0.000000e+00 : f32
      %45 = vector.broadcast %cst_34 : f32 to vector<4x1xf32>
      %c0_35 = arith.constant 0 : index
      %c0_36 = arith.constant 0 : index
      %46 = vector.load %arg7[%c0_35, %c0_36] : memref<4x1xf32, #tpu.memory_space<vmem>>, vector<4x1xf32>
      tpu.vector_store %arg7[%c0_35, %c0_36], %45 {strides = array<i32>} : memref<4x1xf32, #tpu.memory_space<vmem>>, vector<4x1xf32>,
      %cst_37 = arith.constant 0.000000e+00 : f32
      %47 = vector.broadcast %cst_37 : f32 to vector<4x1xf32>
      %c0_38 = arith.constant 0 : index
      %c0_39 = arith.constant 0 : index
      %48 = vector.load %arg8[%c0_38, %c0_39] : memref<4x1xf32, #tpu.memory_space<vmem>>, vector<4x1xf32>
      tpu.vector_store %arg8[%c0_38, %c0_39], %47 {strides = array<i32>} : memref<4x1xf32, #tpu.memory_space<vmem>>, vector<4x1xf32>,
    } else {
    }
    %c0 = arith.constant 0 : index
    %c0_1 = arith.constant 0 : index
    %c0_2 = arith.constant 0 : index
    %3 = vector.load %arg1[%c0, %c0_1, %c0_2] : memref<2x4x256xf32, #tpu.memory_space<vmem>>, vector<2x4x256xf32>
    %c0_3 = arith.constant 0 : index
    %c0_4 = arith.constant 0 : index
    %c0_5 = arith.constant 0 : index
    %4 = vector.load %arg2[%c0_3, %c0_4, %c0_5] : memref<2x1x256xi32, #tpu.memory_space<vmem>>, vector<2x1x256xi32>
    %cst = arith.constant dense<0xFF800000> : vector<2x256xf32>
    %5 = vector.multi_reduction <maximumf>, %3, %cst [1] : vector<2x4x256xf32> to vector<2x256xf32>
    %6 = vector.shape_cast %5 : vector<2x256xf32> to vector<2x1x256xf32>
    %7 = vector.broadcast %6 : vector<2x1x256xf32> to vector<2x4x256xf32>
    %8 = arith.subf %3, %7 : vector<2x4x256xf32>
    %9 = math.exp %8 : vector<2x4x256xf32>
    %cst_6 = arith.constant dense<0.000000e+00> : vector<2x256xf32>
    %10 = vector.multi_reduction <add>, %9, %cst_6 [1] : vector<2x4x256xf32> to vector<2x256xf32>
    %11 = vector.shape_cast %10 : vector<2x256xf32> to vector<2x1x256xf32>
    %12 = vector.broadcast %11 : vector<2x1x256xf32> to vector<2x4x256xf32>
    %13 = arith.divf %9, %12 : vector<2x4x256xf32>
    %c0_7 = arith.constant 0 : index
    %c0_8 = arith.constant 0 : index
    %c0_9 = arith.constant 0 : index
    %14 = vector.load %arg4[%c0_7, %c0_8, %c0_9] : memref<2x4x256xf32, #tpu.memory_space<vmem>>, vector<2x4x256xf32>
    tpu.vector_store %arg4[%c0_7, %c0_8, %c0_9], %13 {strides = array<i32>} : memref<2x4x256xf32, #tpu.memory_space<vmem>>, vector<2x4x256xf32>,
    %15 = tpu.iota {dimensions = array<i32: 1>} : vector<2x4x256xi32>
    %16 = vector.broadcast %4 : vector<2x1x256xi32> to vector<2x4x256xi32>
    %17 = arith.cmpi eq, %15, %16 : vector<2x4x256xi32>
    %cst_10 = arith.constant 0.000000e+00 : f32
    %18 = vector.broadcast %cst_10 : f32 to vector<2x4x256xf32>
    %19 = arith.select %17, %13, %18 : vector<2x4x256xi1>, vector<2x4x256xf32>
    %cst_11 = arith.constant dense<0.000000e+00> : vector<2x4xf32>
    %20 = vector.multi_reduction <add>, %19, %cst_11 [2] : vector<2x4x256xf32> to vector<2x4xf32>
    %21 = vector.shape_cast %20 : vector<2x4xf32> to vector<2x4x1xf32>
    %cst_12 = arith.constant dense<0.000000e+00> : vector<2x4xf32>
    %22 = vector.multi_reduction <add>, %13, %cst_12 [2] : vector<2x4x256xf32> to vector<2x4xf32>
    %23 = vector.shape_cast %22 : vector<2x4xf32> to vector<2x4x1xf32>
    %24 = arith.extui %17 : vector<2x4x256xi1> to vector<2x4x256xi32>
    %25 = arith.sitofp %24 : vector<2x4x256xi32> to vector<2x4x256xf32>
    %cst_13 = arith.constant dense<0.000000e+00> : vector<2x4xf32>
    %26 = vector.multi_reduction <add>, %25, %cst_13 [2] : vector<2x4x256xf32> to vector<2x4xf32>
    %27 = vector.shape_cast %26 : vector<2x4xf32> to vector<2x4x1xf32>
    %c0_14 = arith.constant 0 : index
    %c0_15 = arith.constant 0 : index
    %28 = vector.load %arg6[%c0_14, %c0_15] : memref<4x1xf32, #tpu.memory_space<vmem>>, vector<4x1xf32>
    %cst_16 = arith.constant dense<0.000000e+00> : vector<4x1xf32>
    %29 = vector.multi_reduction <add>, %21, %cst_16 [0] : vector<2x4x1xf32> to vector<4x1xf32>
    %30 = arith.addf %28, %29 : vector<4x1xf32>
    %c0_17 = arith.constant 0 : index
    %c0_18 = arith.constant 0 : index
    %31 = vector.load %arg6[%c0_17, %c0_18] : memref<4x1xf32, #tpu.memory_space<vmem>>, vector<4x1xf32>
    tpu.vector_store %arg6[%c0_17, %c0_18], %30 {strides = array<i32>} : memref<4x1xf32, #tpu.memory_space<vmem>>, vector<4x1xf32>,
    %c0_19 = arith.constant 0 : index
    %c0_20 = arith.constant 0 : index
    %32 = vector.load %arg7[%c0_19, %c0_20] : memref<4x1xf32, #tpu.memory_space<vmem>>, vector<4x1xf32>
    %cst_21 = arith.constant dense<0.000000e+00> : vector<4x1xf32>
    %33 = vector.multi_reduction <add>, %23, %cst_21 [0] : vector<2x4x1xf32> to vector<4x1xf32>
    %34 = arith.addf %32, %33 : vector<4x1xf32>
    %c0_22 = arith.constant 0 : index
    %c0_23 = arith.constant 0 : index
    %35 = vector.load %arg7[%c0_22, %c0_23] : memref<4x1xf32, #tpu.memory_space<vmem>>, vector<4x1xf32>
    tpu.vector_store %arg7[%c0_22, %c0_23], %34 {strides = array<i32>} : memref<4x1xf32, #tpu.memory_space<vmem>>, vector<4x1xf32>,
    %c0_24 = arith.constant 0 : index
    %c0_25 = arith.constant 0 : index
    %36 = vector.load %arg8[%c0_24, %c0_25] : memref<4x1xf32, #tpu.memory_space<vmem>>, vector<4x1xf32>
    %cst_26 = arith.constant dense<0.000000e+00> : vector<4x1xf32>
    %37 = vector.multi_reduction <add>, %27, %cst_26 [0] : vector<2x4x1xf32> to vector<4x1xf32>
    %38 = arith.addf %36, %37 : vector<4x1xf32>
    %c0_27 = arith.constant 0 : index
    %c0_28 = arith.constant 0 : index
    %39 = vector.load %arg8[%c0_27, %c0_28] : memref<4x1xf32, #tpu.memory_space<vmem>>, vector<4x1xf32>
    tpu.vector_store %arg8[%c0_27, %c0_28], %38 {strides = array<i32>} : memref<4x1xf32, #tpu.memory_space<vmem>>, vector<4x1xf32>,
    %c0_i32_29 = arith.constant 0 : i32
    %40 = arith.cmpi eq, %arg0, %c0_i32_29 : i32
    %41 = arith.extui %40 : i1 to i32
    %c0_i32_30 = arith.constant 0 : i32
    %42 = arith.cmpi ne, %41, %c0_i32_30 : i32
    scf.if %42 {
      %c0_31 = arith.constant 0 : index
      %c0_32 = arith.constant 0 : index
      %43 = vector.load %arg3[%c0_31, %c0_32] : memref<4x1xf32, #tpu.memory_space<vmem>>, vector<4x1xf32>
      %c0_33 = arith.constant 0 : index
      %c0_34 = arith.constant 0 : index
      %44 = vector.load %arg6[%c0_33, %c0_34] : memref<4x1xf32, #tpu.memory_space<vmem>>, vector<4x1xf32>
      %cst_35 = arith.constant 2.000000e+00 : f32
      %45 = vector.broadcast %cst_35 : f32 to vector<4x1xf32>
      %46 = arith.mulf %45, %44 : vector<4x1xf32>
      %cst_36 = arith.constant 1.000000e-07 : f32
      %47 = vector.broadcast %cst_36 : f32 to vector<4x1xf32>
      %48 = arith.addf %46, %47 : vector<4x1xf32>
      %c0_37 = arith.constant 0 : index
      %c0_38 = arith.constant 0 : index
      %49 = vector.load %arg7[%c0_37, %c0_38] : memref<4x1xf32, #tpu.memory_space<vmem>>, vector<4x1xf32>
      %c0_39 = arith.constant 0 : index
      %c0_40 = arith.constant 0 : index
      %50 = vector.load %arg8[%c0_39, %c0_40] : memref<4x1xf32, #tpu.memory_space<vmem>>, vector<4x1xf32>
      %51 = arith.addf %49, %50 : vector<4x1xf32>
      %cst_41 = arith.constant 1.000000e-07 : f32
      %52 = vector.broadcast %cst_41 : f32 to vector<4x1xf32>
      %53 = arith.addf %51, %52 : vector<4x1xf32>
      %54 = arith.divf %48, %53 : vector<4x1xf32>
      %cst_42 = arith.constant 1.000000e+00 : f32
      %55 = vector.broadcast %cst_42 : f32 to vector<4x1xf32>
      %56 = arith.subf %55, %54 : vector<4x1xf32>
      %57 = arith.mulf %56, %43 : vector<4x1xf32>
      %58 = vector.shape_cast %57 : vector<4x1xf32> to vector<1x4x1xf32>
      %cst_43 = arith.constant dense<0.000000e+00> : vector<1xf32>
      %59 = vector.multi_reduction <add>, %58, %cst_43 [1, 2] : vector<1x4x1xf32> to vector<1xf32>
      %60 = vector.shape_cast %59 : vector<1xf32> to vector<1x1x1xf32>
      %61 = vector.extract %60[0, 0, 0] : f32 from vector<1x1x1xf32>
      %62 = vector.broadcast %61 : f32 to vector<1x1xf32>
      %63 = vector.shape_cast %43 : vector<4x1xf32> to vector<1x4x1xf32>
      %cst_44 = arith.constant dense<0.000000e+00> : vector<1xf32>
      %64 = vector.multi_reduction <add>, %63, %cst_44 [1, 2] : vector<1x4x1xf32> to vector<1xf32>
      %65 = vector.shape_cast %64 : vector<1xf32> to vector<1x1x1xf32>
      %66 = vector.extract %65[0, 0, 0] : f32 from vector<1x1x1xf32>
      %67 = vector.broadcast %66 : f32 to vector<1x1xf32>
      %68 = arith.divf %62, %67 : vector<1x1xf32>
      %c0_45 = arith.constant 0 : index
      %c0_46 = arith.constant 0 : index
      %69 = vector.load %arg5[%c0_45, %c0_46] : memref<1x1xf32, #tpu.memory_space<vmem>>, vector<1x1xf32>
      tpu.vector_store %arg5[%c0_45, %c0_46], %68 {strides = array<i32>} : memref<1x1xf32, #tpu.memory_space<vmem>>, vector<1x1xf32>,
    } else {
    }
    return
  }
  func.func @transform_0(%arg0: i32) -> (i32, i32, i32) {
    %c0_i32 = arith.constant 0 : i32
    %c0_i32_0 = arith.constant 0 : i32
    %c0_i32_1 = arith.constant 0 : i32
    return %arg0, %c0_i32, %c0_i32_0 : i32, i32, i32
  }
  func.func @transform_1(%arg0: i32) -> (i32, i32, i32) {
    %c0_i32 = arith.constant 0 : i32
    %c0_i32_0 = arith.constant 0 : i32
    %c0_i32_1 = arith.constant 0 : i32
    return %arg0, %c0_i32, %c0_i32_0 : i32, i32, i32
  }
  func.func @transform_2(%arg0: i32) -> (i32, i32) {
    %c0_i32 = arith.constant 0 : i32
    %c0_i32_0 = arith.constant 0 : i32
    %c0_i32_1 = arith.constant 0 : i32
    return %c0_i32, %c0_i32_0 : i32, i32
  }
  func.func @transform_3(%arg0: i32) -> (i32, i32, i32) {
    %c0_i32 = arith.constant 0 : i32
    %c0_i32_0 = arith.constant 0 : i32
    %c0_i32_1 = arith.constant 0 : i32
    return %arg0, %c0_i32, %c0_i32_0 : i32, i32, i32
  }
  func.func @transform_4(%arg0: i32) -> (i32, i32) {
    %c0_i32 = arith.constant 0 : i32
    %c0_i32_0 = arith.constant 0 : i32
    %c0_i32_1 = arith.constant 0 : i32
    return %c0_i32, %c0_i32_0 : i32, i32
  }
}

</mosaic_0001>

<llo_original>
// kernel: tpu_custom_call.1
$region0: #{tpu_custom_call.1}
  #allocation0 [shape = 'u32[]', space=smem, size = 0x4, offset = 0x4, fixed_abs, tag = 'smem constant byte address 0x4 - core index']
  #allocation1 [shape = 'u32[144,128]{1,0:T(1,128)}', space=vmem, size = 0x12000, scoped, tag = 'internal scratch']
  #allocation2 [shape = 'f32[4,1]{1,0:T(4,128)}', space=vmem, size = 0x800, scoped, tag = 'scratch operand']
  #allocation3 [shape = 'f32[4,1]{1,0:T(4,128)}', space=vmem, size = 0x800, scoped, tag = 'scratch operand']
  #allocation4 [shape = 'f32[4,1]{1,0:T(4,128)}', space=vmem, size = 0x800, scoped, tag = 'scratch operand']
  %s0 = inlined_call_operand.hbm [shape: f32[2,4,256], index: 0, kind: input, shape index: {}]
  %s1 = inlined_call_operand.vmem [shape: s32[2,1,256], index: 1, kind: input, shape index: {}]
  %s2 = inlined_call_operand.vmem [shape: f32[4,1], index: 2, kind: input, shape index: {}]
  %s3 = inlined_call_operand.hbm [shape: f32[2,4,256], index: 3, kind: output, shape index: {0}]
  %s4 = inlined_call_operand.hbm [shape: f32[1,1], index: 4, kind: output, shape index: {1}]
  %5 = xla_tuple %s3, %s4
  %s6 = sld [smem:[#allocation0]]
  $region42: #{tpu_custom_call.1} parent=0
    _
  %s8 = ssub.s32 1, %s6
  %s9 = scalar_select 0, %s8, %s6
  $region1: #{tpu_custom_call.1} parent=0
    #allocation5 [shape = 'u8[8192]{0}', space=vmem, size = 0x2000, scoped, tag = 'input window, operand 0, single buffered']
    #allocation6 [shape = 's32[1]{0}', space=sflag, size = 0x4, scoped, tag = 'scoped memory for tpu_custom_call.1']
    #allocation7 [shape = 's32[1]{0}', space=sflag, size = 0x4, scoped, tag = 'scoped memory for tpu_custom_call.1']
    #allocation8 [shape = 'u8[8192]{0}', space=vmem, size = 0x2000, scoped, tag = 'output window, operand 0, single buffered']
    #allocation9 [shape = 'u8[512]{0}', space=vmem, size = 0x400, scoped, tag = 'output window, operand 1, single buffered']
    #allocation10 [shape = 's32[1]{0}', space=sflag, size = 0x4, scoped, tag = 'scoped memory for tpu_custom_call.1']
    %10 = vsyncpa [#allocation6], 0
    %11 = vsyncpa [#allocation7], 0
    %12 = vsyncpa [#allocation10], 0
    // Predicated region
    $region2: #{tpu_custom_call.1} parent=1 // pred_check
      _
    $region3: #{tpu_custom_call.1} parent=1 // pred_check_branch
      %14 = sbr.rel (0) target = $region5
    $region4: #{tpu_custom_call.1} parent=1 // pred_region
      %s16 = ssub.s32 256, 256
      %17 = vsyncadd [#allocation6], %s16
      %s18 = sshll.u32 [#allocation5], 4
      %s19 = int_to_ptr.vmem [resolvable:$true] %s18
      %24 = dma.hbm_to_vmem [thread:$0]  %s0, 256, %s19, [#allocation6], 128, 128, 8
    $region5: #{tpu_custom_call.1} parent=1 // pred_fallthru
      _
    // Predicated region
    $region6: #{tpu_custom_call.1} parent=1 // pred_check
      _
    $region7: #{tpu_custom_call.1} parent=1 // pred_check_branch
      %26 = sbr.rel (0) target = $region9
    $region8: #{tpu_custom_call.1} parent=1 // pred_region
      _
    $region9: #{tpu_custom_call.1} parent=1 // pred_fallthru
      _
    // Predicated region
    $region10: #{tpu_custom_call.1} parent=1 // pred_check
      _
    $region11: #{tpu_custom_call.1} parent=1 // pred_check_branch
      %28 = sbr.rel (0) target = $region13
    $region12: #{tpu_custom_call.1} parent=1 // pred_region
      _
    $region13: #{tpu_custom_call.1} parent=1 // pred_fallthru
      _
    // Predicated region
    $region14: #{tpu_custom_call.1} parent=1 // pred_check
      _
    $region15: #{tpu_custom_call.1} parent=1 // pred_check_branch
      %30 = sbr.rel (0) target = $region17
    $region16: #{tpu_custom_call.1} parent=1 // pred_region
      %31 = dma.done [#allocation6], 256
    $region17: #{tpu_custom_call.1} parent=1 // pred_fallthru
      _
    %p32 = scmp.eq.s32.totalorder 0, 0
    // Predicated region
    $region18: #{tpu_custom_call.1} parent=1 // pred_check
      %p33 = pneg %p32
    $region19: #{tpu_custom_call.1} parent=1 // pred_check_branch
      %35 = sbr.rel (%p33) target = $region21
    $region20: #{tpu_custom_call.1} parent=1 // pred_region
      %vm36 = vcmask 3072
      %37 = vst.msk [vmem:[#allocation2] sm:$0xf] %vm36, 0.0
      %38 = vst.msk [vmem:[#allocation3] sm:$0xf] %vm36, 0.0
      %39 = vst.msk [vmem:[#allocation4] sm:$0xf] %vm36, 0.0
    $region21: #{tpu_custom_call.1} parent=1 // pred_fallthru
      _
    %v40 = vld [vmem:[#allocation5] sm:$0xff]
    %v41 = vld [vmem:[#allocation5 + $0x8] sm:$0xff]
    %v42 = vld [vmem:[%s1] sm:$0x3]
    %v43 = vld [vmem:[%s1 + $0x2] sm:$0x3]
    %v46 = vcombine.high %v40, %v40
    %v47 = vcombine.high %v41, %v41
    %vm50 = vcmask 1043456
    %v51 = vsel %vm50, %v40, -inf
    %v52 = vrot.slane %v51, 4
    %v53 = vmax.f32 %v51, %v52
    %v54 = vrot.slane %v53, 2
    %v55 = vmax.f32 %v53, %v54
    %v56 = vrot.slane %v55, 1
    %v57 = vmax.f32 %v55, %v56
    %v58 = vsel %vm50, %v46, -inf
    %v59 = vrot.slane %v58, 4
    %v60 = vmax.f32 %v58, %v59
    %v61 = vrot.slane %v60, 2
    %v62 = vmax.f32 %v60, %v61
    %v63 = vrot.slane %v62, 1
    %v64 = vmax.f32 %v62, %v63
    %v65 = vsel %vm50, %v41, -inf
    %v66 = vrot.slane %v65, 4
    %v67 = vmax.f32 %v65, %v66
    %v68 = vrot.slane %v67, 2
    %v69 = vmax.f32 %v67, %v68
    %v70 = vrot.slane %v69, 1
    %v71 = vmax.f32 %v69, %v70
    %v72 = vsel %vm50, %v47, -inf
    %v73 = vrot.slane %v72, 4
    %v74 = vmax.f32 %v72, %v73
    %v75 = vrot.slane %v74, 2
    %v76 = vmax.f32 %v74, %v75
    %v77 = vrot.slane %v76, 1
    %v78 = vmax.f32 %v76, %v77
    %v83 = vcombine.low %v57, %v64
    %v84 = vcombine.low %v71, %v78
    %v87 = vsub.f32 %v40, %v83
    %v88 = vsub.f32 %v41, %v84
    %v89 = vmul.f32 %v87, 1.442695
    %v90 = vpow.pop %v89
    %v91 = vmul.f32 %v88, 1.442695
    %v92 = vpow.pop %v91
    %v95 = vcombine.high %v90, %v90
    %v96 = vcombine.high %v92, %v92
    %v99 = vsel %vm50, %v90, 0.0
    %v100 = vrot.slane %v99, 4
    %v101 = vadd.f32 %v99, %v100
    %v102 = vrot.slane %v101, 2
    %v103 = vadd.f32 %v101, %v102
    %v104 = vrot.slane %v103, 1
    %v105 = vadd.f32 %v103, %v104
    %v106 = vsel %vm50, %v95, 0.0
    %v107 = vrot.slane %v106, 4
    %v108 = vadd.f32 %v106, %v107
    %v109 = vrot.slane %v108, 2
    %v110 = vadd.f32 %v108, %v109
    %v111 = vrot.slane %v110, 1
    %v112 = vadd.f32 %v110, %v111
    %v113 = vsel %vm50, %v92, 0.0
    %v114 = vrot.slane %v113, 4
    %v115 = vadd.f32 %v113, %v114
    %v116 = vrot.slane %v115, 2
    %v117 = vadd.f32 %v115, %v116
    %v118 = vrot.slane %v117, 1
    %v119 = vadd.f32 %v117, %v118
    %v120 = vsel %vm50, %v96, 0.0
    %v121 = vrot.slane %v120, 4
    %v122 = vadd.f32 %v120, %v121
    %v123 = vrot.slane %v122, 2
    %v124 = vadd.f32 %v122, %v123
    %v125 = vrot.slane %v124, 1
    %v126 = vadd.f32 %v124, %v125
    %v131 = vcombine.low %v105, %v112
    %v132 = vcombine.low %v119, %v126
    %v135 = vrcp.pop %v131
    %v136 = vmul.f32 %v90, %v135
    %v137 = vrcp.pop %v132
    %v138 = vmul.f32 %v92, %v137
    %139 = vst [vmem:[#allocation8] sm:$0xff] %v136
    %140 = vst [vmem:[#allocation8 + $0x8] sm:$0xff] %v138
    %v141 = vlaneseq
    %v142 = vshrl.u32 %v141, 7
    %v143 = vlaneseq
    %v144 = vshrl.u32 %v143, 7
    %v145 = vsub.s32 0, %v144
    %v146 = vrot.slane %v42, %v145
    %v147 = vlaneseq
    %v148 = vshrl.u32 %v147, 7
    %v149 = vsub.s32 1, %v148
    %v150 = vrot.slane %v42, %v149
    %v151 = vlaneseq
    %v152 = vshrl.u32 %v151, 7
    %v153 = vsub.s32 0, %v152
    %v154 = vrot.slane %v43, %v153
    %v155 = vlaneseq
    %v156 = vshrl.u32 %v155, 7
    %v157 = vsub.s32 1, %v156
    %v158 = vrot.slane %v43, %v157
    %vm159 = vcmp.eq.s32.totalorder %v142, %v146
    %vm160 = vcmp.eq.s32.totalorder %v142, %v150
    %vm161 = vcmp.eq.s32.totalorder %v142, %v154
    %vm162 = vcmp.eq.s32.totalorder %v142, %v158
    %v165 = vcombine.high %v136, %v136
    %v166 = vcombine.high %v138, %v138
    %v169 = vsel %vm159, %v136, 0.0
    %v170 = vsel %vm160, %v165, 0.0
    %v171 = vsel %vm161, %v138, 0.0
    %v172 = vsel %vm162, %v166, 0.0
    %v173 = vsel %vm50, %v169, 0.0
    %v174 = vsel %vm50, %v170, 0.0
    %v175 = vadd.f32 %v173, %v174
    %176 = vadd.xlane.f32.xlu0 %v175
    %v177 = vpop.xlane.xlu0 %176
    %v178 = vsel %vm50, %v171, 0.0
    %v179 = vsel %vm50, %v172, 0.0
    %v180 = vadd.f32 %v178, %v179
    %181 = vadd.xlane.f32.xlu0 %v180
    %v182 = vpop.xlane.xlu0 %181
    %v183 = vsel %vm50, %v136, 0.0
    %v184 = vsel %vm50, %v165, 0.0
    %v185 = vadd.f32 %v183, %v184
    %186 = vadd.xlane.f32.xlu0 %v185
    %v187 = vpop.xlane.xlu0 %186
    %v188 = vsel %vm50, %v138, 0.0
    %v189 = vsel %vm50, %v166, 0.0
    %v190 = vadd.f32 %v188, %v189
    %191 = vadd.xlane.f32.xlu0 %v190
    %v192 = vpop.xlane.xlu0 %191
    %v193 = vsel %vm159, 1, 0
    %v194 = vsel %vm160, 1, 0
    %v195 = vsel %vm161, 1, 0
    %v196 = vsel %vm162, 1, 0
    %v197 = vcvt.s32.f32 %v193
    %v198 = vcvt.s32.f32 %v194
    %v199 = vcvt.s32.f32 %v195
    %v200 = vcvt.s32.f32 %v196
    %v201 = vsel %vm50, %v197, 0.0
    %v202 = vsel %vm50, %v198, 0.0
    %v203 = vadd.f32 %v201, %v202
    %204 = vadd.xlane.f32.xlu0 %v203
    %v205 = vpop.xlane.xlu0 %204
    %v206 = vsel %vm50, %v199, 0.0
    %v207 = vsel %vm50, %v200, 0.0
    %v208 = vadd.f32 %v206, %v207
    %209 = vadd.xlane.f32.xlu0 %v208
    %v210 = vpop.xlane.xlu0 %209
    %v211 = vld [vmem:[#allocation2] sm:$0xf]
    %v212 = vsel %vm50, %v177, 0.0
    %v213 = vsel %vm50, %v182, 0.0
    %v214 = vadd.f32 %v212, %v213
    %v215 = vadd.f32 %v211, %v214
    %vm216 = vcmask 3072
    %217 = vst.msk [vmem:[#allocation2] sm:$0xf] %vm216, %v215
    %v218 = vld [vmem:[#allocation3] sm:$0xf]
    %v219 = vsel %vm50, %v187, 0.0
    %v220 = vsel %vm50, %v192, 0.0
    %v221 = vadd.f32 %v219, %v220
    %v222 = vadd.f32 %v218, %v221
    %223 = vst.msk [vmem:[#allocation3] sm:$0xf] %vm216, %v222
    %v224 = vld [vmem:[#allocation4] sm:$0xf]
    %v225 = vsel %vm50, %v205, 0.0
    %v226 = vsel %vm50, %v210, 0.0
    %v227 = vadd.f32 %v225, %v226
    %v228 = vadd.f32 %v224, %v227
    %229 = vst.msk [vmem:[#allocation4] sm:$0xf] %vm216, %v228
    // Predicated region
    $region22: #{tpu_custom_call.1} parent=1 // pred_check
      %p230 = pneg %p32
    $region23: #{tpu_custom_call.1} parent=1 // pred_check_branch
      %232 = sbr.rel (%p230) target = $region25
    $region24: #{tpu_custom_call.1} parent=1 // pred_region
      %v233 = vld [vmem:[%s2] sm:$0xf]
      %v234 = vld [vmem:[#allocation2] sm:$0xf]
      %v235 = vmul.f32 %v234, 2.0
      %v236 = vadd.f32 %v235, 1e-07
      %v237 = vld [vmem:[#allocation3] sm:$0xf]
      %v238 = vld [vmem:[#allocation4] sm:$0xf]
      %v239 = vadd.f32 %v237, %v238
      %v240 = vadd.f32 %v239, 1e-07
      %v241 = vrcp.pop %v240
      %v242 = vmul.f32 %v236, %v241
      %v243 = vsub.f32 1.0, %v242
      %v244 = vmul.f32 %v243, %v233
      %v245 = vsel %vm216, %v244, 0.0
      %246 = vadd.xlane.f32.xlu0 %v245
      %v247 = vpop.xlane.xlu0 %246
      %v248 = vrot.slane %v247, 4
      %v249 = vadd.f32 %v247, %v248
      %v250 = vrot.slane %v249, 2
      %v251 = vadd.f32 %v249, %v250
      %v252 = vrot.slane %v251, 1
      %v253 = vadd.f32 %v251, %v252
      %s254 = vtos %v253
      %v255 = vstv %s254
      %v256 = vsel %vm216, %v233, 0.0
      %257 = vadd.xlane.f32.xlu0 %v256
      %v258 = vpop.xlane.xlu0 %257
      %v259 = vrot.slane %v258, 4
      %v260 = vadd.f32 %v258, %v259
      %v261 = vrot.slane %v260, 2
      %v262 = vadd.f32 %v260, %v261
      %v263 = vrot.slane %v262, 1
      %v264 = vadd.f32 %v262, %v263
      %s265 = vtos %v264
      %v266 = vstv %s265
      %v267 = vrcp.pop %v266
      %v268 = vmul.f32 %v255, %v267
      %vm269 = vcmask 0
      %270 = vst.msk [vmem:[#allocation9] sm:$0x1] %vm269, %v268
    $region25: #{tpu_custom_call.1} parent=1 // pred_fallthru
      _
    // Predicated region
    $region26: #{tpu_custom_call.1} parent=1 // pred_check
      _
    $region27: #{tpu_custom_call.1} parent=1 // pred_check_branch
      %272 = sbr.rel (0) target = $region29
    $region28: #{tpu_custom_call.1} parent=1 // pred_region
      %s274 = ssub.s32 256, 256
      %275 = vsyncadd [#allocation7], %s274
      %s276 = sshll.u32 [#allocation8], 4
      %s277 = int_to_ptr.vmem [resolvable:$true] %s276
      %282 = dma.vmem_to_hbm [thread:$0]  %s277, 256, %s3, [#allocation7], 128, 128, 8
    $region29: #{tpu_custom_call.1} parent=1 // pred_fallthru
      _
    // Predicated region
    $region30: #{tpu_custom_call.1} parent=1 // pred_check
      _
    $region31: #{tpu_custom_call.1} parent=1 // pred_check_branch
      %284 = sbr.rel (0) target = $region33
    $region32: #{tpu_custom_call.1} parent=1 // pred_region
      %s286 = ssub.s32 16, 16
      %287 = vsyncadd [#allocation10], %s286
      %s289 = sshll.u32 [#allocation9], 4
      %s290 = int_to_ptr.vmem [resolvable:$true] %s289
      %292 = dma.vmem_to_hbm [thread:$0]  %s290, 16, %s4, [#allocation10]
    $region33: #{tpu_custom_call.1} parent=1 // pred_fallthru
      _
    // Predicated region
    $region34: #{tpu_custom_call.1} parent=1 // pred_check
      _
    $region35: #{tpu_custom_call.1} parent=1 // pred_check_branch
      %294 = sbr.rel (0) target = $region37
    $region36: #{tpu_custom_call.1} parent=1 // pred_region
      %295 = dma.done [#allocation7], 256
    $region37: #{tpu_custom_call.1} parent=1 // pred_fallthru
      _
    // Predicated region
    $region38: #{tpu_custom_call.1} parent=1 // pred_check
      _
    $region39: #{tpu_custom_call.1} parent=1 // pred_check_branch
      %297 = sbr.rel (0) target = $region41
    $region40: #{tpu_custom_call.1} parent=1 // pred_region
      %298 = dma.done [#allocation10], 16
    $region41: #{tpu_custom_call.1} parent=1 // pred_fallthru
      _
    %299 = vsyncpa [#allocation6], 1
    %300 = vsyncpa [#allocation7], 1
    %301 = vsyncpa [#allocation10], 1

</llo_original>
